<compile_context>
chip_gen: v7x
topology: tpu7x:2x2x1
jax: 0.10.0
libtpu: 0.0.40
codegen_flags: <defaults>
</compile_context>

<pallas_src>
import functools

import jax
import jax.numpy as jnp
from jax.experimental import pallas as pl
from jax.experimental.pallas import tpu as pltpu

_LANES = 128


def _activate_kernel(x_ref, o_ref, *, a_bit: int, quantize: bool):
    if a_bit == 32:
        # Pure ReLU: exact in the native dtype, no upcast needed.
        o_ref[...] = jnp.maximum(x_ref[...], 0)
    elif not quantize:
        # Clamp only: also exact in the native dtype.
        o_ref[...] = jnp.clip(x_ref[...], 0.0, 1.0)
    else:
        # Quantized clamp: do the round/divide math in f32 so bf16/fp8 inputs
        # land on the same k/(2^a_bit-1) levels as torch (which computes in f32).
        x = x_ref[...].astype(jnp.float32)
        n = float(2 ** a_bit - 1)
        y = jnp.clip(x, 0.0, 1.0)
        y = jnp.round(y * n) / n   # keep the divide for bit-exact torch parity
        o_ref[...] = y.astype(o_ref.dtype)


def _activate_flat_jnp(v, a_bit: int, quantize: bool):
    """Plain-jnp fallback for the <128-element ragged tail / degenerate sizes."""
    if a_bit == 32:
        return jnp.maximum(v, 0)
    y = jnp.clip(v, 0.0, 1.0)
    if quantize:
        n = float(2 ** a_bit - 1)
        y = (jnp.round(y.astype(jnp.float32) * n) / n).astype(v.dtype)
    return y


def activate(x, a_bit: int = 4, quantize: bool = True):
    """Elementwise Activate (relu / clamp + uniform activation quantization)."""
    assert (1 <= a_bit <= 8) or a_bit == 32, "a_bit must be in [1, 8] or 32"
    orig_shape = x.shape
    orig_dtype = x.dtype

    total = x.size
    rows = total // _LANES
    tail = total - rows * _LANES
    flat = x.reshape(-1)

    if rows == 0:
        # Degenerate tiny input (< 128 elements): not worth a kernel launch.
        return _activate_flat_jnp(flat, a_bit, quantize).reshape(orig_shape)

    bulk = flat[: rows * _LANES] if tail else flat
    x2d = bulk.reshape(rows, _LANES)

    itemsize = jnp.dtype(orig_dtype).itemsize
    # dtype-aware block: target ~4 MiB per block regardless of dtype
    # (8192 rows for f32, 16384 for bf16/int8), rounded to a multiple of 32.
    max_rows = max(32, ((4 << 20) // (_LANES * itemsize)) // 32 * 32)

    if rows <= 256:
        # Small input: one full-array block (legal for any row count).
        tr = rows
        grid = (1,)
    else:
        # Aim for at least ~4 blocks so the pipeline overlaps read/compute/write
        # (and both v7x TensorCores stream data), block capped at ~4 MiB.
        # tr is a multiple of 32 -> layout-clean for f32/bf16/int8; the partial
        # edge block is masked by Pallas.
        tr = min(max_rows, ((pl.cdiv(rows, 4) + 31) // 32) * 32)
        grid = (pl.cdiv(rows, tr),)

    kernel = functools.partial(_activate_kernel, a_bit=a_bit, quantize=quantize)

    n_elems = rows * _LANES
    cost = pl.CostEstimate(
        flops=3 * n_elems,
        transcendentals=0,
        bytes_accessed=2 * n_elems * itemsize,
    )

    y2d = pl.pallas_call(
        kernel,
        out_shape=jax.ShapeDtypeStruct((rows, _LANES), orig_dtype),
        grid_spec=pltpu.PrefetchScalarGridSpec(
            num_scalar_prefetch=0,
            grid=grid,
            in_specs=[pl.BlockSpec((tr, _LANES), lambda i: (i, 0))],
            out_specs=pl.BlockSpec((tr, _LANES), lambda i: (i, 0)),
        ),
        compiler_params=pltpu.CompilerParams(
            # "parallel" lets the runtime shard the row stream across
            # TensorCores on multi-TC chips (v7x); no effect on v5e/v6e.
            dimension_semantics=("parallel",),
            # 4 MiB block x 2 refs x 2 buffers = 16 MiB pipelined footprint:
            # raise the scoped limit above v5e's 16 MiB default while staying
            # well under v7x's 64 MiB physical VMEM.
            vmem_limit_bytes=32 * 1024 * 1024,
        ),
        cost_estimate=cost,
        input_output_aliases={0: 0},
    )(x2d)

    y = y2d.reshape(-1)
    if tail:
        y_tail = _activate_flat_jnp(flat[rows * _LANES:], a_bit, quantize)
        y = jnp.concatenate([y, y_tail.astype(orig_dtype)])
    return y.reshape(orig_shape)


def _activate_ref(x, a_bit, quantize):
    # pure-JAX reference mirroring the PyTorch module
    if a_bit == 32:
        return jnp.maximum(x, 0)
    y = jnp.clip(x, 0.0, 1.0)
    if quantize:
        n = float(2 ** a_bit - 1)
        y = (jnp.round(y.astype(jnp.float32) * n) / n).astype(x.dtype)
    return y


if __name__ == "__main__":
    key = jax.random.PRNGKey(0)
    # NCHW input, small shape
    x = jax.random.normal(key, (2, 4, 16, 16), dtype=jnp.float32) * 1.5

    # a_bit = 4, quantized path
    out = jax.block_until_ready(activate(x, a_bit=4, quantize=True))
    assert out.shape == x.shape and out.dtype == x.dtype
    assert jnp.allclose(out, _activate_ref(x, 4, True), atol=1e-6)

    # a_bit = 32 (pure ReLU) path
    out32 = jax.block_until_ready(activate(x, a_bit=32, quantize=True))
    assert jnp.allclose(out32, _activate_ref(x, 32, True), atol=1e-6)

    # quantize=False path (clamp only)
    outnq = jax.block_until_ready(activate(x, a_bit=4, quantize=False))
    assert jnp.allclose(outnq, _activate_ref(x, 4, False), atol=1e-6)

    # bf16 ReLU path (native-dtype, no f32 upcast)
    xb = x.astype(jnp.bfloat16)
    outb = jax.block_until_ready(activate(xb, a_bit=32, quantize=True))
    assert outb.dtype == jnp.bfloat16
    assert jnp.allclose(outb.astype(jnp.float32),
                        jnp.maximum(xb, 0).astype(jnp.float32), atol=1e-6)

    # larger, non-tile-multiple shape -> exercises the multi-block path with a
    # masked partial edge block
    xl = jax.random.normal(jax.random.PRNGKey(1), (3, 8, 100, 128), jnp.float32)
    outl = jax.block_until_ready(activate(xl, a_bit=8, quantize=True))
    assert jnp.allclose(outl, _activate_ref(xl, 8, True), atol=1e-6)

    # ragged shape (total % 128 != 0) -> kernel on the bulk, jnp on the tail
    xr = jax.random.normal(jax.random.PRNGKey(2), (3, 5, 7, 11), jnp.float32)
    outr = jax.block_until_ready(activate(xr, a_bit=4, quantize=True))
    assert jnp.allclose(outr, _activate_ref(xr, 4, True), atol=1e-6)

    print("KERNEL_OK")
</pallas_src>

<mosaic_0001>
module attributes {stable_mosaic.version = 11 : i64} {
  func.func @_activate_kernel(%arg0: i32, %arg1: memref<16x128xf32, #tpu.memory_space<vmem>>, %arg2: memref<16x128xf32, #tpu.memory_space<vmem>>) attributes {dimension_semantics = [#tpu.dimension_semantics<parallel>], iteration_bounds = array<i64: 1>, scalar_prefetch = 0 : i64, scratch_operands = 0 : i64, tpu.core_type = #tpu.core_type<tc>, window_params = [{transform_indices = @transform_0, window_bounds = array<i64: 16, 128>}, {transform_indices = @transform_1, window_bounds = array<i64: 16, 128>}]} {
    %c0 = arith.constant 0 : index
    %c0_0 = arith.constant 0 : index
    %0 = vector.load %arg1[%c0, %c0_0] : memref<16x128xf32, #tpu.memory_space<vmem>>, vector<16x128xf32>
    %cst = arith.constant 0.000000e+00 : f32
    %cst_1 = arith.constant 1.000000e+00 : f32
    %1 = vector.broadcast %cst : f32 to vector<16x128xf32>
    %2 = arith.maximumf %1, %0 : vector<16x128xf32>
    %3 = vector.broadcast %cst_1 : f32 to vector<16x128xf32>
    %4 = arith.minimumf %3, %2 : vector<16x128xf32>
    %cst_2 = arith.constant 1.500000e+01 : f32
    %5 = vector.broadcast %cst_2 : f32 to vector<16x128xf32>
    %6 = arith.mulf %4, %5 : vector<16x128xf32>
    %7 = math.roundeven %6 : vector<16x128xf32>
    %cst_3 = arith.constant 1.500000e+01 : f32
    %8 = vector.broadcast %cst_3 : f32 to vector<16x128xf32>
    %9 = arith.divf %7, %8 : vector<16x128xf32>
    %c0_4 = arith.constant 0 : index
    %c0_5 = arith.constant 0 : index
    %10 = vector.load %arg2[%c0_4, %c0_5] : memref<16x128xf32, #tpu.memory_space<vmem>>, vector<16x128xf32>
    tpu.vector_store %arg2[%c0_4, %c0_5], %9 {strides = array<i32>} : memref<16x128xf32, #tpu.memory_space<vmem>>, vector<16x128xf32>,
    return
  }
  func.func @transform_0(%arg0: i32) -> (i32, i32) {
    %c0_i32 = arith.constant 0 : i32
    %c0_i32_0 = arith.constant 0 : i32
    return %arg0, %c0_i32 : i32, i32
  }
  func.func @transform_1(%arg0: i32) -> (i32, i32) {
    %c0_i32 = arith.constant 0 : i32
    %c0_i32_0 = arith.constant 0 : i32
    return %arg0, %c0_i32 : i32, i32
  }
}

</mosaic_0001>

<llo_original>
// kernel: tpu_custom_call.1
$region0: #{tpu_custom_call.1}
  #allocation0 [shape = 'u32[]', space=smem, size = 0x4, offset = 0x4, fixed_abs, tag = 'smem constant byte address 0x4 - core index']
  #allocation1 [shape = 'u32[144,128]{1,0:T(1,128)}', space=vmem, size = 0x12000, scoped, tag = 'internal scratch']
  %s0 = inlined_call_operand.hbm [shape: f32[16,128], index: 0, kind: input, shape index: {}, may-alias: {0,1}]
  %s1 = inlined_call_operand.hbm [shape: f32[16,128], index: 1, kind: output, shape index: {}, may-alias: {0,1}]
  %s2 = sld [smem:[#allocation0]]
  $region18: #{tpu_custom_call.1} parent=0
    _
  %s4 = ssub.s32 1, %s2
  %s5 = scalar_select 0, %s4, %s2
  $region1: #{tpu_custom_call.1} parent=0
    #allocation2 [shape = 'u8[8192]{0}', space=vmem, size = 0x2000, scoped, tag = 'input window, operand 0, single buffered']
    #allocation3 [shape = 's32[1]{0}', space=sflag, size = 0x4, scoped, tag = 'scoped memory for tpu_custom_call.1']
    #allocation4 [shape = 's32[1]{0}', space=sflag, size = 0x4, scoped, tag = 'scoped memory for tpu_custom_call.1']
    #allocation5 [shape = 'u8[8192]{0}', space=vmem, size = 0x2000, scoped, tag = 'output window, operand 0, single buffered']
    %6 = vsyncpa [#allocation3], 0
    %7 = vsyncpa [#allocation4], 0
    // Predicated region
    $region2: #{tpu_custom_call.1} parent=1 // pred_check
      _
    $region3: #{tpu_custom_call.1} parent=1 // pred_check_branch
      %9 = sbr.rel (0) target = $region5
    $region4: #{tpu_custom_call.1} parent=1 // pred_region
      %s11 = ssub.s32 256, 256
      %12 = vsyncadd [#allocation3], %s11
      %s13 = sshll.u32 [#allocation2], 4
      %s14 = int_to_ptr.vmem [resolvable:$true] %s13
      %19 = dma.hbm_to_vmem [thread:$0]  %s0, 256, %s14, [#allocation3], 128, 128, 8
    $region5: #{tpu_custom_call.1} parent=1 // pred_fallthru
      _
    // Predicated region
    $region6: #{tpu_custom_call.1} parent=1 // pred_check
      _
    $region7: #{tpu_custom_call.1} parent=1 // pred_check_branch
      %21 = sbr.rel (0) target = $region9
    $region8: #{tpu_custom_call.1} parent=1 // pred_region
      %22 = dma.done [#allocation3], 256
    $region9: #{tpu_custom_call.1} parent=1 // pred_fallthru
      _
    %v23 = vld [vmem:[#allocation2] sm:$0xff]
    %v24 = vld [vmem:[#allocation2 + $0x8] sm:$0xff]
    %v25 = vmax.f32 %v23, 0.0
    %v26 = vmax.f32 %v24, 0.0
    %v27 = vmin.f32 %v25, 1.0
    %v28 = vmin.f32 %v26, 1.0
    %v29 = vmul.f32 %v27, 15.0
    %v30 = vmul.f32 %v28, 15.0
    %v31 = vround.ne.pseudo %v29
    %v32 = vround.ne.pseudo %v30
    %v33 = vrcp.pop 15.0
    %v34 = vmul.f32 %v31, %v33
    %v35 = vmul.f32 %v32, %v33
    %36 = vst [vmem:[#allocation5] sm:$0xff] %v34
    %37 = vst [vmem:[#allocation5 + $0x8] sm:$0xff] %v35
    // Predicated region
    $region10: #{tpu_custom_call.1} parent=1 // pred_check
      _
    $region11: #{tpu_custom_call.1} parent=1 // pred_check_branch
      %39 = sbr.rel (0) target = $region13
    $region12: #{tpu_custom_call.1} parent=1 // pred_region
      %s41 = ssub.s32 256, 256
      %42 = vsyncadd [#allocation4], %s41
      %s43 = sshll.u32 [#allocation5], 4
      %s44 = int_to_ptr.vmem [resolvable:$true] %s43
      %49 = dma.vmem_to_hbm [thread:$0]  %s44, 256, %s1, [#allocation4], 128, 128, 8
    $region13: #{tpu_custom_call.1} parent=1 // pred_fallthru
      _
    // Predicated region
    $region14: #{tpu_custom_call.1} parent=1 // pred_check
      _
    $region15: #{tpu_custom_call.1} parent=1 // pred_check_branch
      %51 = sbr.rel (0) target = $region17
    $region16: #{tpu_custom_call.1} parent=1 // pred_region
      %52 = dma.done [#allocation4], 256
    $region17: #{tpu_custom_call.1} parent=1 // pred_fallthru
      _
    %53 = vsyncpa [#allocation3], 1
    %54 = vsyncpa [#allocation4], 1

</llo_original>
